<compile_context>
chip_gen: v6e
topology: v6e:2x2x1
jax: 0.10.0
libtpu: 0.0.40
codegen_flags: <defaults>
</compile_context>

<pallas_src>
import functools

import jax
import jax.numpy as jnp
from jax.experimental import pallas as pl
from jax.experimental.pallas import tpu as pltpu

_LANE = 128                      # TPU lane width (last dim of every tile)
_SUBLANE = 8                     # f32 sublane tiling
_MIN_KERNEL_ELEMS = _SUBLANE * _LANE   # below one (8,128) tile, fused XLA wins
_IDENTITY = (1.0, 0.0, 0.0, 0.0, 1.0, 0.0)


def _round_up(x, m):
    return ((x + m - 1) // m) * m


def _is_v7x():
    # v7x has 2 TensorCores per chip -> worth splitting the reduction grid.
    try:
        kind = jax.devices()[0].device_kind.lower()
        return ("v7" in kind) or ("7x" in kind)
    except Exception:
        return False


def _idloss_kernel(theta_ref, out_ref, acc_ref, *, n_valid, inv_n, penalty,
                   block_rows, lane, tiles_per_split):
    """theta_ref: (block_rows, lane) dense tile of the flat row-major view.

    Grid is (num_splits, tiles_per_split): axis 0 "parallel" (per-core partial
    sums), axis 1 "arbitrary" (the reduction).
    acc_ref: VMEM (block_rows, lane) f32 elementwise accumulator (per split).
    out_ref: (8, 128) f32 block holding this split's partial sum (broadcast),
             written once in the finalize step.
    """
    s = pl.program_id(0)
    t = pl.program_id(1)

    @pl.when(t == 0)
    def _init():
        acc_ref[...] = jnp.zeros_like(acc_ref)

    # Keep the HBM->VMEM DMA in the input dtype; widen in-register.
    x = theta_ref[...].astype(jnp.float32)                 # (block_rows, lane)

    r = jax.lax.broadcasted_iota(jnp.int32, x.shape, 0)    # local row
    c = jax.lax.broadcasted_iota(jnp.int32, x.shape, 1)    # lane / column

    # Identity transform [1,0,0,0,1,0] generated in-kernel.
    # flat_idx % 6 == (2*r + c) % 6 (block offsets are multiples of 6); the
    # mod of the small value m is computed exactly via an f32 floor-divide.
    m = 2 * r + c
    q = jnp.floor(m.astype(jnp.float32) *
                  jnp.float32(1.0 / 6.0)).astype(jnp.int32)
    p = m - 6 * q                                          # == flat_idx % 6
    ident = jnp.where((p == 0) | (p == 4),
                      jnp.float32(1.0), jnp.float32(0.0))

    diff = x - ident
    if penalty == "l1":
        contrib = jnp.abs(diff)
    else:                                                  # "l2"
        contrib = diff * diff

    # Mask out everything past the real data: the zero-padded flat tail, the
    # ragged last row-block and any clamped overshoot block of an uneven split.
    blk = s * tiles_per_split + t                          # logical block id
    row0 = blk * block_rows
    flat_idx = (r + row0) * lane + c
    contrib = jnp.where(flat_idx < n_valid, contrib, jnp.float32(0.0))

    # Pure elementwise VPU accumulate in the hot loop (hidden under the DMA);
    # the cross-lane reduce happens exactly once below.
    acc_ref[...] += contrib

    @pl.when(t == tiles_per_split - 1)
    def _finalize():
        total = jnp.sum(acc_ref[...], keepdims=True) * jnp.float32(inv_n)
        out_ref[...] = jnp.broadcast_to(total, out_ref.shape)  # lane-dense store


def id_loss(theta, penalty="l1", *, tile_rows=2048, num_splits=None,
            use_kernel=None):
    """mean(|theta - ID|) (l1) or mean((theta - ID)^2) (l2), ID = [1,0,0,0,1,0].

    theta: (B, 2, 3) or (B, 6) affine parameters, any float dtype.
    Returns a float32 scalar.
    """
    assert penalty in ("l1", "l2"), penalty
    B = theta.shape[0]
    n_params = 1
    for d in theta.shape[1:]:
        n_params *= d
    assert n_params == 6, "IDloss expects 6 affine parameters per batch element"
    n = B * n_params

    if use_kernel is None:
        use_kernel = n >= _MIN_KERNEL_ELEMS
    if not use_kernel:
        # Tiny problem (e.g. B=2): one vreg of data; a standalone kernel is
        # pure launch overhead, so let XLA fuse a plain expression instead.
        ident = jnp.asarray(_IDENTITY, jnp.float32)
        d = theta.astype(jnp.float32).reshape(-1, 6) - ident
        return jnp.mean(jnp.abs(d)) if penalty == "l1" else jnp.mean(d * d)

    # ---- Lane-dense flat layout (no transpose, minimal padding) ------------
    flat = theta.reshape(-1)                      # flat_idx = b*6 + p
    itemsize = jnp.dtype(theta.dtype).itemsize
    sub = max(_SUBLANE, 32 // max(itemsize, 1))   # 8 f32, 16 bf16, 32 int8
    chunk = sub * _LANE
    padded_n = _round_up(n, chunk)
    if padded_n != n:                             # <= one layout tile of pad
        flat = jnp.pad(flat, (0, padded_n - n))
    rows = padded_n // _LANE                      # multiple of `sub`
    arr = flat.reshape(rows, _LANE)               # fully dense 2-D slab

    # Block rows: multiple of `sub` (sublane tiling) and of 3 (so every block
    # spans a multiple of 6 flat elements -> block-invariant identity pattern).
    # Capped so VMEM use stays a few MiB and the f32 mod-6 trick stays exact.
    row_granule = 3 * sub
    tr = _round_up(min(max(tile_rows, row_granule), 4096), row_granule)
    block_rows = rows if rows <= tr else tr
    tiles_total = pl.cdiv(rows, block_rows)

    # Optional per-core split of the reduction (v7x: 2 TensorCores per chip).
    if num_splits is None:
        num_splits = 2 if (_is_v7x() and tiles_total >= 2) else 1
    num_splits = max(1, min(int(num_splits), tiles_total))
    tiles_per_split = pl.cdiv(tiles_total, num_splits)

    kernel = functools.partial(
        _idloss_kernel,
        n_valid=n,
        inv_n=1.0 / n,
        penalty=penalty,
        block_rows=block_rows,
        lane=_LANE,
        tiles_per_split=tiles_per_split,
    )

    def theta_index_map(s, t):
        # Clamp so overshoot iterations of an uneven split stay in bounds; the
        # kernel masks their contribution to zero via the flat-index check.
        return (jnp.minimum(s * tiles_per_split + t, tiles_total - 1), 0)

    out = pl.pallas_call(
        kernel,
        out_shape=jax.ShapeDtypeStruct((num_splits * _SUBLANE, _LANE),
                                       jnp.float32),
        grid=(num_splits, tiles_per_split),
        in_specs=[
            pl.BlockSpec((block_rows, _LANE), theta_index_map),
        ],
        out_specs=pl.BlockSpec((_SUBLANE, _LANE), lambda s, t: (s, 0)),
        scratch_shapes=[pltpu.VMEM((block_rows, _LANE), jnp.float32)],
        compiler_params=pltpu.CompilerParams(
            dimension_semantics=("parallel", "arbitrary")),
    )(arr)

    # Each split's (8,128) output block is filled with its partial sum.
    partials = out[::_SUBLANE, 0]                 # (num_splits,)
    return jnp.sum(partials)                      # float32 scalar


def _reference(theta, penalty):
    ident = jnp.asarray(_IDENTITY, jnp.float32)
    d = theta.astype(jnp.float32).reshape(-1, 6) - ident
    return jnp.mean(jnp.abs(d)) if penalty == "l1" else jnp.mean(d * d)


if __name__ == "__main__":
    key = jax.random.PRNGKey(0)
    k1, k2, k3 = jax.random.split(key, 3)

    # B=2: typical spatial-transformer localization-net batch.  Check both the
    # forced Pallas-kernel path and the auto (fused-jnp short-circuit) path.
    theta_small = jax.random.normal(k1, (2, 2, 3), dtype=jnp.float32)
    for pen in ("l1", "l2"):
        ref = _reference(theta_small, pen)
        got_kernel = jax.block_until_ready(
            id_loss(theta_small, penalty=pen, use_kernel=True))
        got_auto = jax.block_until_ready(id_loss(theta_small, penalty=pen))
        assert jnp.allclose(got_kernel, ref, rtol=1e-5, atol=1e-6), (
            pen, got_kernel, ref)
        assert jnp.allclose(got_auto, ref, rtol=1e-5, atol=1e-6), (
            pen, got_auto, ref)

    # Larger batch with a small block: multi-tile grid, cross-step VMEM
    # accumulator, ragged last row-block and padded-tail masking.
    theta_big = jax.random.normal(k2, (1500, 2, 3), dtype=jnp.float32)
    for pen in ("l1", "l2"):
        ref = _reference(theta_big, pen)
        got = jax.block_until_ready(
            id_loss(theta_big, penalty=pen, tile_rows=24))
        assert jnp.allclose(got, ref, rtol=1e-5, atol=1e-6), (pen, got, ref)

    # Explicit 2-way split (per-core partial sums on v7x; runs sequentially but
    # stays correct on 1-TensorCore chips), including an uneven split that
    # exercises the clamped index_map + overshoot-block masking.
    ref = _reference(theta_big, "l1")
    got = jax.block_until_ready(
        id_loss(theta_big, penalty="l1", tile_rows=24, num_splits=2))
    assert jnp.allclose(got, ref, rtol=1e-5, atol=1e-6), (got, ref)

    # bf16 input: dtype-preserving HBM->VMEM DMA + in-kernel f32 widening,
    # with the default (single-tile) and a multi-tile block size.
    theta_bf16 = jax.random.normal(k3, (1500, 2, 3), dtype=jnp.bfloat16)
    ref = _reference(theta_bf16, "l2")
    got_default = jax.block_until_ready(id_loss(theta_bf16, penalty="l2"))
    got_tiled = jax.block_until_ready(
        id_loss(theta_bf16, penalty="l2", tile_rows=48))
    assert jnp.allclose(got_default, ref, rtol=1e-5, atol=1e-6), (
        got_default, ref)
    assert jnp.allclose(got_tiled, ref, rtol=1e-5, atol=1e-6), (got_tiled, ref)

    print("KERNEL_OK")
</pallas_src>

<mosaic_0001>
module attributes {stable_mosaic.version = 11 : i64} {
  func.func @_idloss_kernel(%arg0: i32, %arg1: i32, %arg2: memref<8x128xf32, #tpu.memory_space<vmem>>, %arg3: memref<8x128xf32, #tpu.memory_space<vmem>>, %arg4: memref<8x128xf32, #tpu.memory_space<vmem>>) attributes {dimension_semantics = [#tpu.dimension_semantics<parallel>, #tpu.dimension_semantics<arbitrary>], iteration_bounds = array<i64: 1, 1>, scalar_prefetch = 0 : i64, scratch_operands = 1 : i64, tpu.core_type = #tpu.core_type<tc>, window_params = [{transform_indices = @transform_0, window_bounds = array<i64: 8, 128>}, {transform_indices = @transform_1, window_bounds = array<i64: 8, 128>}]} {
    %c0_i32 = arith.constant 0 : i32
    %0 = arith.cmpi eq, %arg1, %c0_i32 : i32
    %1 = arith.extui %0 : i1 to i32
    %c0_i32_0 = arith.constant 0 : i32
    %2 = arith.cmpi ne, %1, %c0_i32_0 : i32
    scf.if %2 {
      %cst_12 = arith.constant 0.000000e+00 : f32
      %45 = vector.broadcast %cst_12 : f32 to vector<8x128xf32>
      %c0_13 = arith.constant 0 : index
      %c0_14 = arith.constant 0 : index
      %46 = vector.load %arg4[%c0_13, %c0_14] : memref<8x128xf32, #tpu.memory_space<vmem>>, vector<8x128xf32>
      tpu.vector_store %arg4[%c0_13, %c0_14], %45 {strides = array<i32>} : memref<8x128xf32, #tpu.memory_space<vmem>>, vector<8x128xf32>,
    } else {
    }
    %c0 = arith.constant 0 : index
    %c0_1 = arith.constant 0 : index
    %3 = vector.load %arg2[%c0, %c0_1] : memref<8x128xf32, #tpu.memory_space<vmem>>, vector<8x128xf32>
    %4 = tpu.iota {dimensions = array<i32: 0>} : vector<8x128xi32>
    %5 = tpu.iota {dimensions = array<i32: 1>} : vector<8x128xi32>
    %c2_i32 = arith.constant 2 : i32
    %6 = vector.broadcast %c2_i32 : i32 to vector<8x128xi32>
    %7 = arith.muli %6, %4 : vector<8x128xi32>
    %8 = arith.addi %7, %5 : vector<8x128xi32>
    %9 = arith.sitofp %8 : vector<8x128xi32> to vector<8x128xf32>
    %cst = arith.constant 0.166666672 : f32
    %10 = vector.broadcast %cst : f32 to vector<8x128xf32>
    %11 = arith.mulf %9, %10 : vector<8x128xf32>
    %12 = math.floor %11 : vector<8x128xf32>
    %13 = arith.fptosi %12 : vector<8x128xf32> to vector<8x128xi32>
    %c6_i32 = arith.constant 6 : i32
    %14 = vector.broadcast %c6_i32 : i32 to vector<8x128xi32>
    %15 = arith.muli %14, %13 : vector<8x128xi32>
    %16 = arith.subi %8, %15 : vector<8x128xi32>
    %c0_i32_2 = arith.constant 0 : i32
    %17 = vector.broadcast %c0_i32_2 : i32 to vector<8x128xi32>
    %18 = arith.cmpi eq, %16, %17 : vector<8x128xi32>
    %c4_i32 = arith.constant 4 : i32
    %19 = vector.broadcast %c4_i32 : i32 to vector<8x128xi32>
    %20 = arith.cmpi eq, %16, %19 : vector<8x128xi32>
    %21 = arith.ori %18, %20 : vector<8x128xi1>
    %cst_3 = arith.constant 1.000000e+00 : f32
    %cst_4 = arith.constant 0.000000e+00 : f32
    %22 = vector.broadcast %cst_3 : f32 to vector<8x128xf32>
    %23 = vector.broadcast %cst_4 : f32 to vector<8x128xf32>
    %24 = arith.select %21, %22, %23 : vector<8x128xi1>, vector<8x128xf32>
    %25 = arith.subf %3, %24 : vector<8x128xf32>
    %26 = math.absf %25 : vector<8x128xf32>
    %c1_i32 = arith.constant 1 : i32
    %27 = arith.muli %arg0, %c1_i32 : i32
    %28 = arith.addi %27, %arg1 : i32
    %c8_i32 = arith.constant 8 : i32
    %29 = arith.muli %28, %c8_i32 : i32
    %30 = vector.broadcast %29 : i32 to vector<8x128xi32>
    %31 = arith.addi %4, %30 : vector<8x128xi32>
    %c128_i32 = arith.constant 128 : i32
    %32 = vector.broadcast %c128_i32 : i32 to vector<8x128xi32>
    %33 = arith.muli %31, %32 : vector<8x128xi32>
    %34 = arith.addi %33, %5 : vector<8x128xi32>
    %c12_i32 = arith.constant 12 : i32
    %35 = vector.broadcast %c12_i32 : i32 to vector<8x128xi32>
    %36 = arith.cmpi slt, %34, %35 : vector<8x128xi32>
    %cst_5 = arith.constant 0.000000e+00 : f32
    %37 = vector.broadcast %cst_5 : f32 to vector<8x128xf32>
    %38 = arith.select %36, %26, %37 : vector<8x128xi1>, vector<8x128xf32>
    %c0_6 = arith.constant 0 : index
    %c0_7 = arith.constant 0 : index
    %39 = vector.load %arg4[%c0_6, %c0_7] : memref<8x128xf32, #tpu.memory_space<vmem>>, vector<8x128xf32>
    %40 = arith.addf %39, %38 : vector<8x128xf32>
    %c0_8 = arith.constant 0 : index
    %c0_9 = arith.constant 0 : index
    %41 = vector.load %arg4[%c0_8, %c0_9] : memref<8x128xf32, #tpu.memory_space<vmem>>, vector<8x128xf32>
    tpu.vector_store %arg4[%c0_8, %c0_9], %40 {strides = array<i32>} : memref<8x128xf32, #tpu.memory_space<vmem>>, vector<8x128xf32>,
    %c0_i32_10 = arith.constant 0 : i32
    %42 = arith.cmpi eq, %arg1, %c0_i32_10 : i32
    %43 = arith.extui %42 : i1 to i32
    %c0_i32_11 = arith.constant 0 : i32
    %44 = arith.cmpi ne, %43, %c0_i32_11 : i32
    scf.if %44 {
      %c0_12 = arith.constant 0 : index
      %c0_13 = arith.constant 0 : index
      %45 = vector.load %arg4[%c0_12, %c0_13] : memref<8x128xf32, #tpu.memory_space<vmem>>, vector<8x128xf32>
      %46 = vector.shape_cast %45 : vector<8x128xf32> to vector<1x8x128xf32>
      %cst_14 = arith.constant dense<0.000000e+00> : vector<1xf32>
      %47 = vector.multi_reduction <add>, %46, %cst_14 [1, 2] : vector<1x8x128xf32> to vector<1xf32>
      %48 = vector.shape_cast %47 : vector<1xf32> to vector<1x1x1xf32>
      %49 = vector.extract %48[0, 0, 0] : f32 from vector<1x1x1xf32>
      %50 = vector.broadcast %49 : f32 to vector<1x1xf32>
      %cst_15 = arith.constant 0.0833333358 : f32
      %51 = vector.broadcast %cst_15 : f32 to vector<1x1xf32>
      %52 = arith.mulf %50, %51 : vector<1x1xf32>
      %53 = vector.shape_cast %52 : vector<1x1xf32> to vector<1x1xf32>
      %54 = vector.broadcast %53 : vector<1x1xf32> to vector<8x128xf32>
      %c0_16 = arith.constant 0 : index
      %c0_17 = arith.constant 0 : index
      %55 = vector.load %arg3[%c0_16, %c0_17] : memref<8x128xf32, #tpu.memory_space<vmem>>, vector<8x128xf32>
      tpu.vector_store %arg3[%c0_16, %c0_17], %54 {strides = array<i32>} : memref<8x128xf32, #tpu.memory_space<vmem>>, vector<8x128xf32>,
    } else {
    }
    return
  }
  func.func @transform_0(%arg0: i32, %arg1: i32) -> (i32, i32) {
    %c1_i32 = arith.constant 1 : i32
    %0 = arith.muli %arg0, %c1_i32 : i32
    %1 = arith.addi %0, %arg1 : i32
    %c0_i32 = arith.constant 0 : i32
    %2 = arith.minsi %1, %c0_i32 : i32
    %c0_i32_0 = arith.constant 0 : i32
    %c0_i32_1 = arith.constant 0 : i32
    return %2, %c0_i32_0 : i32, i32
  }
  func.func @transform_1(%arg0: i32, %arg1: i32) -> (i32, i32) {
    %c0_i32 = arith.constant 0 : i32
    %c0_i32_0 = arith.constant 0 : i32
    return %arg0, %c0_i32 : i32, i32
  }
}

</mosaic_0001>

<llo_original>
// kernel: tpu_custom_call.1
$region0: #{tpu_custom_call.1}
  #allocation0 [shape = 'u32[]', space=smem, size = 0x4, offset = 0x4, fixed_abs, tag = 'smem constant byte address 0x4 - core index']
  #allocation1 [shape = 'u32[144,128]{1,0:T(1,128)}', space=vmem, size = 0x12000, scoped, tag = 'internal scratch']
  #allocation2 [shape = 'f32[8,128]{1,0:T(8,128)}', space=vmem, size = 0x1000, scoped, tag = 'scratch operand']
  %s0 = inlined_call_operand.hbm [shape: f32[8,128], index: 0, kind: input, shape index: {}]
  %s1 = inlined_call_operand.hbm [shape: f32[8,128], index: 1, kind: output, shape index: {}]
  %s2 = sld [smem:[#allocation0]]
  $region26: #{tpu_custom_call.1} parent=0
    _
  %s4 = ssub.s32 1, %s2
  %s5 = scalar_select 0, %s4, %s2
  $region1: #{tpu_custom_call.1} parent=0
    #allocation3 [shape = 'u8[4096]{0}', space=vmem, size = 0x1000, scoped, tag = 'input window, operand 0, single buffered']
    #allocation4 [shape = 's32[1]{0}', space=sflag, size = 0x4, scoped, tag = 'scoped memory for tpu_custom_call.1']
    #allocation5 [shape = 's32[1]{0}', space=sflag, size = 0x4, scoped, tag = 'scoped memory for tpu_custom_call.1']
    #allocation6 [shape = 'u8[4096]{0}', space=vmem, size = 0x1000, scoped, tag = 'output window, operand 0, single buffered']
    %6 = vsyncpa [#allocation4], 0
    %7 = vsyncpa [#allocation5], 0
    // Predicated region
    $region2: #{tpu_custom_call.1} parent=1 // pred_check
      _
    $region3: #{tpu_custom_call.1} parent=1 // pred_check_branch
      %9 = sbr.rel (0) target = $region5
    $region4: #{tpu_custom_call.1} parent=1 // pred_region
      %s10 = sadd.s32 0, 0
      %p11 = scmp.lt.s32.totalorder %s10, 0
      %s12 = scalar_select %p11, %s10, 0
      %s14 = ssub.s32 128, 128
      %15 = vsyncadd [#allocation4], %s14
      %s16 = smul.addr %s12, 128
      %s17 = scalar_lea.hbm %s0, %s16
      %s19 = sshll.u32 [#allocation3], 4
      %s20 = int_to_ptr.vmem [resolvable:$true] %s19
      %22 = dma.hbm_to_vmem [thread:$0]  %s17, 128, %s20, [#allocation4]
    $region5: #{tpu_custom_call.1} parent=1 // pred_fallthru
      _
    // Predicated region
    $region6: #{tpu_custom_call.1} parent=1 // pred_check
      _
    $region7: #{tpu_custom_call.1} parent=1 // pred_check_branch
      %24 = sbr.rel (0) target = $region9
    $region8: #{tpu_custom_call.1} parent=1 // pred_region
      %25 = dma.done [#allocation4], 128
    $region9: #{tpu_custom_call.1} parent=1 // pred_fallthru
      _
    %s26 = sadd.s32 0, 0
    %p27 = scmp.lt.s32.totalorder %s26, 0
    %s28 = scalar_select %p27, %s26, 0
    %p29 = scmp.eq.s32.totalorder 0, 0
    // Predicated region
    $region10: #{tpu_custom_call.1} parent=1 // pred_check
      %p30 = pneg %p29
    $region11: #{tpu_custom_call.1} parent=1 // pred_check_branch
      %32 = sbr.rel (%p30) target = $region13
    $region12: #{tpu_custom_call.1} parent=1 // pred_region
      %33 = vst [vmem:[#allocation2] sm:$0xff] 0.0
    $region13: #{tpu_custom_call.1} parent=1 // pred_fallthru
      _
    %v34 = vld [vmem:[#allocation3] sm:$0xff]
    %v35 = vlaneseq
    %v36 = vshrl.u32 %v35, 7
    %v37 = vlaneseq
    %v38 = vand.u32 %v37, 127
    %v39 = vmul.u32 %v36, 2
    %v40 = vadd.s32 %v39, %v38
    %v41 = vcvt.s32.f32 %v40
    %v42 = vmul.f32 %v41, 0.16666667
    %v43 = vfloor.f32 %v42
    %v44 = vcvt.f32.s32.to.zero.pseudo %v43
    %v45 = vmul.u32 %v44, 6
    %v46 = vsub.s32 %v40, %v45
    %vm47 = vcmp.eq.s32.totalorder %v46, 0
    %vm48 = vcmp.eq.s32.totalorder %v46, 4
    %vm49 = vmor %vm47, %vm48
    %v50 = vsel %vm49, 1.0, 0.0
    %v51 = vsub.f32 %v34, %v50
    %v52 = vand.u32 2147483647, %v51
    %s53 = sadd.s32 0, 0
    %s54 = smul.u32 %s53, 8
    %v55 = vstv %s54
    %v56 = vadd.s32 %v36, %v55
    %v57 = vmul.u32 %v56, 128
    %v58 = vadd.s32 %v57, %v38
    %vm59 = vcmp.lt.s32.totalorder %v58, 12
    %v60 = vsel %vm59, %v52, 0.0
    %v61 = vld [vmem:[#allocation2] sm:$0xff]
    %v62 = vadd.f32 %v61, %v60
    %63 = vst [vmem:[#allocation2] sm:$0xff] %v62
    // Predicated region
    $region14: #{tpu_custom_call.1} parent=1 // pred_check
      %p64 = pneg %p29
    $region15: #{tpu_custom_call.1} parent=1 // pred_check_branch
      %66 = sbr.rel (%p64) target = $region17
    $region16: #{tpu_custom_call.1} parent=1 // pred_region
      %v67 = vld [vmem:[#allocation2] sm:$0xff]
      %68 = vadd.xlane.f32.xlu0 %v67
      %v69 = vpop.xlane.xlu0 %68
      %v70 = vrot.slane %v69, 4
      %v71 = vadd.f32 %v69, %v70
      %v72 = vrot.slane %v71, 2
      %v73 = vadd.f32 %v71, %v72
      %v74 = vrot.slane %v73, 1
      %v75 = vadd.f32 %v73, %v74
      %s76 = vtos %v75
      %v77 = vstv %s76
      %v78 = vmul.f32 %v77, 0.083333336
      %79 = vst [vmem:[#allocation6] sm:$0xff] %v78
    $region17: #{tpu_custom_call.1} parent=1 // pred_fallthru
      _
    // Predicated region
    $region18: #{tpu_custom_call.1} parent=1 // pred_check
      _
    $region19: #{tpu_custom_call.1} parent=1 // pred_check_branch
      %81 = sbr.rel (0) target = $region21
    $region20: #{tpu_custom_call.1} parent=1 // pred_region
      %s83 = ssub.s32 128, 128
      %84 = vsyncadd [#allocation5], %s83
      %s86 = sshll.u32 [#allocation6], 4
      %s87 = int_to_ptr.vmem [resolvable:$true] %s86
      %89 = dma.vmem_to_hbm [thread:$0]  %s87, 128, %s1, [#allocation5]
    $region21: #{tpu_custom_call.1} parent=1 // pred_fallthru
      _
    // Predicated region
    $region22: #{tpu_custom_call.1} parent=1 // pred_check
      _
    $region23: #{tpu_custom_call.1} parent=1 // pred_check_branch
      %91 = sbr.rel (0) target = $region25
    $region24: #{tpu_custom_call.1} parent=1 // pred_region
      %92 = dma.done [#allocation5], 128
    $region25: #{tpu_custom_call.1} parent=1 // pred_fallthru
      _
    %93 = vsyncpa [#allocation4], 1
    %94 = vsyncpa [#allocation5], 1

</llo_original>
